<compile_context>
chip_gen: v7x
topology: tpu7x:2x2x1
jax: 0.10.0
libtpu: 0.0.40
codegen_flags: <defaults>
</compile_context>

<pallas_src>
import math

import jax
import jax.numpy as jnp
from jax.experimental import pallas as pl
from jax.experimental.pallas import tpu as pltpu


def _se_kernel(x_ref, w1t_ref, b1_ref, w2_ref, b2_ref, o_ref):
    # x_ref: (1, C, HW); weights: w1t (C, R), b1 (1, R), w2 (C, R), b2 (C, 1).
    xb = x_ref[0]                                  # (C, HW)
    xf = xb.astype(jnp.float32)

    # --- squeeze: global average pool over spatial (lane) axis, f32 accumulate ---
    inv_hw = 1.0 / float(xb.shape[-1])
    pooled = jnp.sum(xf, axis=-1, keepdims=True) * inv_hw          # (C, 1)

    w1t = w1t_ref[...].astype(jnp.float32)                         # (C, R)
    b1 = b1_ref[...].astype(jnp.float32)                           # (1, R)
    w2 = w2_ref[...].astype(jnp.float32)                           # (C, R)
    b2 = b2_ref[...].astype(jnp.float32)                           # (C, 1)

    # --- FC1 + ReLU:  h[r] = relu( sum_c W1[r, c] * pooled[c] + b1[r] ) ---
    h = jnp.sum(w1t * pooled, axis=0, keepdims=True) + b1          # (1, R)
    h = jnp.maximum(h, 0.0)

    # --- FC2 + sigmoid:  s[c] = sigmoid( sum_r W2[c, r] * h[r] + b2[c] ) ---
    z = jnp.sum(w2 * h, axis=1, keepdims=True) + b2                # (C, 1)
    s = 1.0 / (1.0 + jnp.exp(-z))                                  # (C, 1), EUP

    # --- excite: channel-wise rescale, broadcast over the lane (spatial) axis ---
    o_ref[0] = (xf * s).astype(o_ref.dtype)


def squeeze_excitation_pallas(x, w_squeeze, b_squeeze, w_excite, b_excite):
    """SqueezeExcitation forward.

    Args:
      x:         (N, C, H, W)
      w_squeeze: (R, C)   weight of Conv2d(C, R, 1), squeezed to 2D
      b_squeeze: (R,)
      w_excite:  (C, R)   weight of Conv2d(R, C, 1), squeezed to 2D
      b_excite:  (C,)
    Returns:
      (N, C, H, W), same dtype as x.
    """
    N, C, H, W = x.shape
    HW = H * W
    R = w_squeeze.shape[0]

    x3 = x.reshape(N, C, HW)            # free (contiguous) view, no HBM copy
    w1t = w_squeeze.T                   # (C, R)
    b1r = b_squeeze.reshape(1, R)
    w2 = w_excite                       # (C, R)
    b2c = b_excite.reshape(C, 1)

    out3 = pl.pallas_call(
        _se_kernel,
        out_shape=jax.ShapeDtypeStruct((N, C, HW), x.dtype),
        grid_spec=pltpu.PrefetchScalarGridSpec(
            num_scalar_prefetch=0,
            grid=(N,),
            in_specs=[
                pl.BlockSpec((1, C, HW), lambda n: (n, 0, 0)),   # x: one sample per step
                pl.BlockSpec((C, R), lambda n: (0, 0)),          # w1^T (resident)
                pl.BlockSpec((1, R), lambda n: (0, 0)),          # b1
                pl.BlockSpec((C, R), lambda n: (0, 0)),          # w2
                pl.BlockSpec((C, 1), lambda n: (0, 0)),          # b2
            ],
            out_specs=pl.BlockSpec((1, C, HW), lambda n: (n, 0, 0)),
        ),
        compiler_params=pltpu.CompilerParams(
            dimension_semantics=("parallel",),                   # batch across TCs on v7x
        ),
    )(x3, w1t, b1r, w2, b2c)

    return out3.reshape(N, C, H, W)


if __name__ == "__main__":
    key = jax.random.PRNGKey(0)
    N, C, H, W = 2, 4, 16, 16
    reduction = 8
    R = int(math.ceil(C / reduction))   # = 1

    k1, k2, k3, k4, k5 = jax.random.split(key, 5)
    x = jax.random.normal(k1, (N, C, H, W), dtype=jnp.float32)
    w_squeeze = 0.5 * jax.random.normal(k2, (R, C), dtype=jnp.float32)
    b_squeeze = 0.1 * jax.random.normal(k3, (R,), dtype=jnp.float32)
    w_excite = 0.5 * jax.random.normal(k4, (C, R), dtype=jnp.float32)
    b_excite = 0.1 * jax.random.normal(k5, (C,), dtype=jnp.float32)

    y = squeeze_excitation_pallas(x, w_squeeze, b_squeeze, w_excite, b_excite)
    y = jax.block_until_ready(y)

    # Pure-JAX reference (matches the PyTorch module).
    pooled = jnp.mean(x, axis=(2, 3))                               # (N, C)
    h = jnp.maximum(pooled @ w_squeeze.T + b_squeeze, 0.0)          # (N, R)
    s = 1.0 / (1.0 + jnp.exp(-(h @ w_excite.T + b_excite)))         # (N, C)
    y_ref = x * s[:, :, None, None]

    assert y.shape == x.shape, f"shape mismatch: {y.shape} vs {x.shape}"
    assert y.dtype == x.dtype, f"dtype mismatch: {y.dtype} vs {x.dtype}"
    assert bool(jnp.allclose(y, y_ref, atol=1e-5, rtol=1e-5)), "SE output mismatch vs reference"

    print("KERNEL_OK")
</pallas_src>

<mosaic_0001>
module attributes {stable_mosaic.version = 11 : i64} {
  func.func @_se_kernel(%arg0: i32, %arg1: memref<1x4x256xf32, #tpu.memory_space<vmem>>, %arg2: memref<4x1xf32, #tpu.memory_space<vmem>>, %arg3: memref<1x1xf32, #tpu.memory_space<vmem>>, %arg4: memref<4x1xf32, #tpu.memory_space<vmem>>, %arg5: memref<4x1xf32, #tpu.memory_space<vmem>>, %arg6: memref<1x4x256xf32, #tpu.memory_space<vmem>>) attributes {dimension_semantics = [#tpu.dimension_semantics<parallel>], iteration_bounds = array<i64: 2>, scalar_prefetch = 0 : i64, scratch_operands = 0 : i64, tpu.core_type = #tpu.core_type<tc>, window_params = [{transform_indices = @transform_0, window_bounds = array<i64: 1, 4, 256>}, {pipeline_mode = #tpu.pipeline_mode<synchronous>, transform_indices = @transform_1, window_bounds = array<i64: 4, 1>}, {pipeline_mode = #tpu.pipeline_mode<synchronous>, transform_indices = @transform_2, window_bounds = array<i64: 1, 1>}, {pipeline_mode = #tpu.pipeline_mode<synchronous>, transform_indices = @transform_3, window_bounds = array<i64: 4, 1>}, {pipeline_mode = #tpu.pipeline_mode<synchronous>, transform_indices = @transform_4, window_bounds = array<i64: 4, 1>}, {transform_indices = @transform_5, window_bounds = array<i64: 1, 4, 256>}]} {
    %c0 = arith.constant 0 : index
    %c0_0 = arith.constant 0 : index
    %c0_1 = arith.constant 0 : index
    %0 = vector.load %arg1[%c0, %c0_0, %c0_1] : memref<1x4x256xf32, #tpu.memory_space<vmem>>, vector<1x4x256xf32>
    %1 = vector.shape_cast %0 : vector<1x4x256xf32> to vector<4x256xf32>
    %cst = arith.constant dense<0.000000e+00> : vector<4xf32>
    %2 = vector.multi_reduction <add>, %1, %cst [1] : vector<4x256xf32> to vector<4xf32>
    %3 = vector.shape_cast %2 : vector<4xf32> to vector<4x1xf32>
    %cst_2 = arith.constant 3.906250e-03 : f32
    %4 = vector.broadcast %cst_2 : f32 to vector<4x1xf32>
    %5 = arith.mulf %3, %4 : vector<4x1xf32>
    %c0_3 = arith.constant 0 : index
    %c0_4 = arith.constant 0 : index
    %6 = vector.load %arg2[%c0_3, %c0_4] : memref<4x1xf32, #tpu.memory_space<vmem>>, vector<4x1xf32>
    %c0_5 = arith.constant 0 : index
    %c0_6 = arith.constant 0 : index
    %7 = vector.load %arg3[%c0_5, %c0_6] : memref<1x1xf32, #tpu.memory_space<vmem>>, vector<1x1xf32>
    %c0_7 = arith.constant 0 : index
    %c0_8 = arith.constant 0 : index
    %8 = vector.load %arg4[%c0_7, %c0_8] : memref<4x1xf32, #tpu.memory_space<vmem>>, vector<4x1xf32>
    %c0_9 = arith.constant 0 : index
    %c0_10 = arith.constant 0 : index
    %9 = vector.load %arg5[%c0_9, %c0_10] : memref<4x1xf32, #tpu.memory_space<vmem>>, vector<4x1xf32>
    %10 = arith.mulf %6, %5 : vector<4x1xf32>
    %cst_11 = arith.constant dense<0.000000e+00> : vector<1xf32>
    %11 = vector.multi_reduction <add>, %10, %cst_11 [0] : vector<4x1xf32> to vector<1xf32>
    %12 = vector.shape_cast %11 : vector<1xf32> to vector<1x1xf32>
    %13 = arith.addf %12, %7 : vector<1x1xf32>
    %cst_12 = arith.constant 0.000000e+00 : f32
    %14 = vector.broadcast %cst_12 : f32 to vector<1x1xf32>
    %15 = arith.maximumf %13, %14 : vector<1x1xf32>
    %16 = vector.broadcast %15 : vector<1x1xf32> to vector<4x1xf32>
    %17 = arith.mulf %8, %16 : vector<4x1xf32>
    %cst_13 = arith.constant dense<0.000000e+00> : vector<4xf32>
    %18 = vector.multi_reduction <add>, %17, %cst_13 [1] : vector<4x1xf32> to vector<4xf32>
    %19 = vector.shape_cast %18 : vector<4xf32> to vector<4x1xf32>
    %20 = arith.addf %19, %9 : vector<4x1xf32>
    %cst_14 = arith.constant 0.000000e+00 : f32
    %21 = vector.broadcast %cst_14 : f32 to vector<4x1xf32>
    %22 = arith.subf %21, %20 : vector<4x1xf32>
    %23 = math.exp %22 : vector<4x1xf32>
    %cst_15 = arith.constant 1.000000e+00 : f32
    %24 = vector.broadcast %cst_15 : f32 to vector<4x1xf32>
    %25 = arith.addf %24, %23 : vector<4x1xf32>
    %cst_16 = arith.constant 1.000000e+00 : f32
    %26 = vector.broadcast %cst_16 : f32 to vector<4x1xf32>
    %27 = arith.divf %26, %25 : vector<4x1xf32>
    %28 = vector.broadcast %27 : vector<4x1xf32> to vector<4x256xf32>
    %29 = arith.mulf %1, %28 : vector<4x256xf32>
    %c0_17 = arith.constant 0 : index
    %c0_18 = arith.constant 0 : index
    %c0_19 = arith.constant 0 : index
    %30 = vector.load %arg6[%c0_17, %c0_18, %c0_19] : memref<1x4x256xf32, #tpu.memory_space<vmem>>, vector<1x4x256xf32>
    %31 = vector.shape_cast %30 : vector<1x4x256xf32> to vector<4x256xf32>
    %32 = vector.shape_cast %29 : vector<4x256xf32> to vector<1x4x256xf32>
    tpu.vector_store %arg6[%c0_17, %c0_18, %c0_19], %32 {strides = array<i32>} : memref<1x4x256xf32, #tpu.memory_space<vmem>>, vector<1x4x256xf32>,
    return
  }
  func.func @transform_0(%arg0: i32) -> (i32, i32, i32) {
    %c0_i32 = arith.constant 0 : i32
    %c0_i32_0 = arith.constant 0 : i32
    %c0_i32_1 = arith.constant 0 : i32
    return %arg0, %c0_i32, %c0_i32_0 : i32, i32, i32
  }
  func.func @transform_1(%arg0: i32) -> (i32, i32) {
    %c0_i32 = arith.constant 0 : i32
    %c0_i32_0 = arith.constant 0 : i32
    %c0_i32_1 = arith.constant 0 : i32
    return %c0_i32, %c0_i32_0 : i32, i32
  }
  func.func @transform_2(%arg0: i32) -> (i32, i32) {
    %c0_i32 = arith.constant 0 : i32
    %c0_i32_0 = arith.constant 0 : i32
    %c0_i32_1 = arith.constant 0 : i32
    return %c0_i32, %c0_i32_0 : i32, i32
  }
  func.func @transform_3(%arg0: i32) -> (i32, i32) {
    %c0_i32 = arith.constant 0 : i32
    %c0_i32_0 = arith.constant 0 : i32
    %c0_i32_1 = arith.constant 0 : i32
    return %c0_i32, %c0_i32_0 : i32, i32
  }
  func.func @transform_4(%arg0: i32) -> (i32, i32) {
    %c0_i32 = arith.constant 0 : i32
    %c0_i32_0 = arith.constant 0 : i32
    %c0_i32_1 = arith.constant 0 : i32
    return %c0_i32, %c0_i32_0 : i32, i32
  }
  func.func @transform_5(%arg0: i32) -> (i32, i32, i32) {
    %c0_i32 = arith.constant 0 : i32
    %c0_i32_0 = arith.constant 0 : i32
    %c0_i32_1 = arith.constant 0 : i32
    return %arg0, %c0_i32, %c0_i32_0 : i32, i32, i32
  }
}

</mosaic_0001>

<llo_original>
// kernel: tpu_custom_call.1
$region0: #{tpu_custom_call.1}
  #allocation0 [shape = 'u32[]', space=smem, size = 0x4, offset = 0x4, fixed_abs, tag = 'smem constant byte address 0x4 - core index']
  #allocation1 [shape = 'u32[144,128]{1,0:T(1,128)}', space=vmem, size = 0x12000, scoped, tag = 'internal scratch']
  #allocation2 [shape = 'f32[1,1]{1,0:T(1,128)S(1)}', space=vmem, size = 0x200, scoped, tag = 'scoped memory for tpu_custom_call.1']
  %s0 = inlined_call_operand.vmem [shape: f32[2,4,256], index: 0, kind: input, shape index: {}]
  %s1 = inlined_call_operand.vmem [shape: f32[4,1], index: 1, kind: input, shape index: {}]
  %s2 = inlined_call_operand.<no memory space> [shape: f32[1,1], index: 2, kind: input, shape index: {}]
  %s3 = inlined_call_operand.vmem [shape: f32[4,1], index: 3, kind: input, shape index: {}]
  %s4 = inlined_call_operand.vmem [shape: f32[4,1], index: 4, kind: input, shape index: {}]
  %s5 = inlined_call_operand.hbm [shape: f32[2,4,256], index: 5, kind: output, shape index: {}]
  %s6 = sld [smem:[#allocation0]]
  $region53: #{tpu_custom_call.1} parent=0
    _
  %s8 = ssub.s32 1, %s6
  %s9 = scalar_select 0, %s8, %s6
  %v10 = vstv %s2
  %11 = vst [vmem:[#allocation2] sm:$0x1] %v10
  $region1: #{tpu_custom_call.1} parent=0
    #allocation3 [shape = 'u8[8192]{0}', space=vmem, size = 0x2000, scoped, tag = 'output window, operand 0']
    #allocation4 [shape = 's32[2]{0}', space=sflag, size = 0x8, scoped, tag = 'scoped memory for tpu_custom_call.1']
    %12 = vsyncpa [#allocation4], 0
    %s13 = scalar_lea.sflag [#allocation4], 1
    %14 = vsyncpa %s13, 0
    loop: start=0, step=1, limit=4
    $region2: #{tpu_custom_call.1} parent=1 // loop_pre_header
      _
    $region3: #{tpu_custom_call.1} parent=1 // loop_header
      %s16 = sphi 0, %s20
      %p17 = scmp.ge.s32.totalorder %s16, 4
      %s26 = sphi 0, %s28
      %s29 = sphi 0, %s26
      %s30 = sphi 0, %s29
      %s46 = sphi 0, %s30
      %s50 = sphi 0, %s50
      %s52 = sphi 0, %s50
      %s53 = sphi 0, %s52
      %s67 = sphi 0, %s53
      %s71 = sphi 0, %s71
      %s73 = sphi 0, %s71
      %s74 = sphi 0, %s73
      %s88 = sphi 0, %s74
      %s92 = sphi 0, %s92
      %s94 = sphi 0, %s92
      %s95 = sphi 0, %s94
      %s109 = sphi 0, %s95
      %s113 = sphi 0, %s113
      %s115 = sphi 0, %s113
      %s116 = sphi 0, %s115
      %s130 = sphi 0, %s116
      %s136 = sphi 0, %s138
      %s139 = sphi 0, %s136
      %s140 = sphi 0, %s139
      %s156 = sphi 0, %s140
    $region4: #{tpu_custom_call.1} parent=1 // loop_header_branch
      %19 = sbr.rel (%p17) target = $region8
    $region5: #{tpu_custom_call.1} parent=1 // loop_body
      %s21 = ssub.s32 %s16, 1
      %s22 = ssub.s32 %s16, 2
      %s23 = sadd.s32 %s16, 1
      %s24 = ssub.s32 %s16, %s23
      %p25 = scmp.eq.s32.totalorder %s24, 0
      %s27 = sadd.s32 %s26, 1
      %s28 = scalar_select %p25, %s26, %s27
      %p31 = pneg %p25
      %p32 = scmp.eq.s32.totalorder %s16, 1
      %p33 = por %p31, %p32
      %p34 = scmp.ne.s32.totalorder %s26, %s29
      %p35 = scmp.eq.s32.totalorder %s16, 0
      %p36 = por %p34, %p35
      %p37 = scmp.ne.s32.totalorder %s26, %s29
      %p38 = scmp.eq.s32.totalorder %s21, 1
      %p39 = por %p37, %p38
      %p40 = scmp.ne.s32.totalorder %s29, %s30
      %p41 = scmp.eq.s32.totalorder %s21, 0
      %p42 = por %p40, %p41
      %p43 = scmp.ne.s32.totalorder %s29, %s30
      %p44 = scmp.eq.s32.totalorder %s22, 1
      %p45 = por %p43, %p44
      %p47 = scmp.ne.s32.totalorder %s30, %s46
      %p48 = scmp.eq.s32.totalorder %s22, 0
      %p49 = por %p47, %p48
      %s51 = sadd.s32 %s50, 1
      %p54 = scmp.eq.s32.totalorder %s16, 1
      %p55 = scmp.ne.s32.totalorder %s50, %s52
      %p56 = scmp.eq.s32.totalorder %s16, 0
      %p57 = por %p55, %p56
      %p58 = scmp.ne.s32.totalorder %s50, %s52
      %p59 = scmp.eq.s32.totalorder %s21, 1
      %p60 = por %p58, %p59
      %p61 = scmp.ne.s32.totalorder %s52, %s53
      %p62 = scmp.eq.s32.totalorder %s21, 0
      %p63 = por %p61, %p62
      %p64 = scmp.ne.s32.totalorder %s52, %s53
      %p65 = scmp.eq.s32.totalorder %s22, 1
      %p66 = por %p64, %p65
      %p68 = scmp.ne.s32.totalorder %s53, %s67
      %p69 = scmp.eq.s32.totalorder %s22, 0
      %p70 = por %p68, %p69
      %s72 = sadd.s32 %s71, 1
      %p75 = scmp.eq.s32.totalorder %s16, 1
      %p76 = scmp.ne.s32.totalorder %s71, %s73
      %p77 = scmp.eq.s32.totalorder %s16, 0
      %p78 = por %p76, %p77
      %p79 = scmp.ne.s32.totalorder %s71, %s73
      %p80 = scmp.eq.s32.totalorder %s21, 1
      %p81 = por %p79, %p80
      %p82 = scmp.ne.s32.totalorder %s73, %s74
      %p83 = scmp.eq.s32.totalorder %s21, 0
      %p84 = por %p82, %p83
      %p85 = scmp.ne.s32.totalorder %s73, %s74
      %p86 = scmp.eq.s32.totalorder %s22, 1
      %p87 = por %p85, %p86
      %p89 = scmp.ne.s32.totalorder %s74, %s88
      %p90 = scmp.eq.s32.totalorder %s22, 0
      %p91 = por %p89, %p90
      %s93 = sadd.s32 %s92, 1
      %p96 = scmp.eq.s32.totalorder %s16, 1
      %p97 = scmp.ne.s32.totalorder %s92, %s94
      %p98 = scmp.eq.s32.totalorder %s16, 0
      %p99 = por %p97, %p98
      %p100 = scmp.ne.s32.totalorder %s92, %s94
      %p101 = scmp.eq.s32.totalorder %s21, 1
      %p102 = por %p100, %p101
      %p103 = scmp.ne.s32.totalorder %s94, %s95
      %p104 = scmp.eq.s32.totalorder %s21, 0
      %p105 = por %p103, %p104
      %p106 = scmp.ne.s32.totalorder %s94, %s95
      %p107 = scmp.eq.s32.totalorder %s22, 1
      %p108 = por %p106, %p107
      %p110 = scmp.ne.s32.totalorder %s95, %s109
      %p111 = scmp.eq.s32.totalorder %s22, 0
      %p112 = por %p110, %p111
      %s114 = sadd.s32 %s113, 1
      %p117 = scmp.eq.s32.totalorder %s16, 1
      %p118 = scmp.ne.s32.totalorder %s113, %s115
      %p119 = scmp.eq.s32.totalorder %s16, 0
      %p120 = por %p118, %p119
      %p121 = scmp.ne.s32.totalorder %s113, %s115
      %p122 = scmp.eq.s32.totalorder %s21, 1
      %p123 = por %p121, %p122
      %p124 = scmp.ne.s32.totalorder %s115, %s116
      %p125 = scmp.eq.s32.totalorder %s21, 0
      %p126 = por %p124, %p125
      %p127 = scmp.ne.s32.totalorder %s115, %s116
      %p128 = scmp.eq.s32.totalorder %s22, 1
      %p129 = por %p127, %p128
      %p131 = scmp.ne.s32.totalorder %s116, %s130
      %p132 = scmp.eq.s32.totalorder %s22, 0
      %p133 = por %p131, %p132
      %s134 = ssub.s32 %s16, %s23
      %p135 = scmp.eq.s32.totalorder %s134, 0
      %s137 = sadd.s32 %s136, 1
      %s138 = scalar_select %p135, %s136, %s137
      %p141 = pneg %p135
      %p142 = scmp.eq.s32.totalorder %s16, 1
      %p143 = por %p141, %p142
      %p144 = scmp.ne.s32.totalorder %s136, %s139
      %p145 = scmp.eq.s32.totalorder %s16, 0
      %p146 = por %p144, %p145
      %p147 = scmp.ne.s32.totalorder %s136, %s139
      %p148 = scmp.eq.s32.totalorder %s21, 1
      %p149 = por %p147, %p148
      %p150 = scmp.ne.s32.totalorder %s139, %s140
      %p151 = scmp.eq.s32.totalorder %s21, 0
      %p152 = por %p150, %p151
      %p153 = scmp.ne.s32.totalorder %s139, %s140
      %p154 = scmp.eq.s32.totalorder %s22, 1
      %p155 = por %p153, %p154
      %p157 = scmp.ne.s32.totalorder %s140, %s156
      %p158 = scmp.eq.s32.totalorder %s22, 0
      %p159 = por %p157, %p158
      %p160 = scmp.le.s32.totalorder 1, %s16
      %p161 = scmp.lt.s32.totalorder %s16, 3
      %p162 = pnand %p160, %p161
      %p163 = pneg %p162
      // Predicated region
      $region9: #{tpu_custom_call.1} parent=5 // pred_check
        _
      $region10: #{tpu_custom_call.1} parent=5 // pred_check_branch
        %165 = sbr.rel (%p162) target = $region12
      $region11: #{tpu_custom_call.1} parent=5 // pred_region
        %s166 = ssub.s32 %s16, 1
        // Predicated region
        $region13: #{tpu_custom_call.1} parent=11 // pred_check
          %p167 = pneg %p63
        $region14: #{tpu_custom_call.1} parent=11 // pred_check_branch
          %169 = sbr.rel (%p167) target = $region16
        $region15: #{tpu_custom_call.1} parent=11 // pred_region
          _
        $region16: #{tpu_custom_call.1} parent=11 // pred_fallthru
          _
        // Predicated region
        $region17: #{tpu_custom_call.1} parent=11 // pred_check
          %p170 = pneg %p84
        $region18: #{tpu_custom_call.1} parent=11 // pred_check_branch
          %172 = sbr.rel (%p170) target = $region20
        $region19: #{tpu_custom_call.1} parent=11 // pred_region
          _
        $region20: #{tpu_custom_call.1} parent=11 // pred_fallthru
          _
        // Predicated region
        $region21: #{tpu_custom_call.1} parent=11 // pred_check
          %p173 = pneg %p105
        $region22: #{tpu_custom_call.1} parent=11 // pred_check_branch
          %175 = sbr.rel (%p173) target = $region24
        $region23: #{tpu_custom_call.1} parent=11 // pred_region
          _
        $region24: #{tpu_custom_call.1} parent=11 // pred_fallthru
          _
        // Predicated region
        $region25: #{tpu_custom_call.1} parent=11 // pred_check
          %p176 = pneg %p126
        $region26: #{tpu_custom_call.1} parent=11 // pred_check_branch
          %178 = sbr.rel (%p176) target = $region28
        $region27: #{tpu_custom_call.1} parent=11 // pred_region
          _
        $region28: #{tpu_custom_call.1} parent=11 // pred_fallthru
          _
      $region12: #{tpu_custom_call.1} parent=5 // pred_fallthru
        _
      %p179 = scmp.lt.s32.totalorder %s16, 2
      // Predicated region
      $region29: #{tpu_custom_call.1} parent=5 // pred_check
        %p180 = pneg %p179
      $region30: #{tpu_custom_call.1} parent=5 // pred_check_branch
        %182 = sbr.rel (%p180) target = $region32
      $region31: #{tpu_custom_call.1} parent=5 // pred_region
        // Predicated region
        $region33: #{tpu_custom_call.1} parent=31 // pred_check
          %p183 = pneg %p36
        $region34: #{tpu_custom_call.1} parent=31 // pred_check_branch
          %185 = sbr.rel (%p183) target = $region36
        $region35: #{tpu_custom_call.1} parent=31 // pred_region
          %p186 = scmp.lt.s32.totalorder %s16, 1
          %s187 = scalar_select %p186, %s16, 1
          %s188 = smul.addr %s187, 2
          %s189 = smul.addr %s188, 4
          %s190 = scalar_lea.vmem %s0, %s189
        $region36: #{tpu_custom_call.1} parent=31 // pred_fallthru
          _
      $region32: #{tpu_custom_call.1} parent=5 // pred_fallthru
        _
      %p191 = scmp.le.s32.totalorder 1, %s16
      %p192 = scmp.lt.s32.totalorder %s16, 3
      %p193 = pnand %p191, %p192
      %p194 = pneg %p193
      // Predicated region
      $region37: #{tpu_custom_call.1} parent=5 // pred_check
        _
      $region38: #{tpu_custom_call.1} parent=5 // pred_check_branch
        %196 = sbr.rel (%p193) target = $region40
      $region39: #{tpu_custom_call.1} parent=5 // pred_region
        %s197 = ssub.s32 %s16, 1
        %p198 = scmp.lt.s32.totalorder %s21, 1
        %s199 = scalar_select %p198, %s21, 1
        %s200 = smul.addr %s199, 2
        %s201 = smul.addr %s200, 4
        %s202 = scalar_lea.vmem %s0, %s201
        %p203 = pneg %p42
        %p204 = pneg %p39
        %p205 = pneg %p63
        %p206 = pneg %p60
        %p207 = pneg %p84
        %p208 = pneg %p81
        %p209 = pneg %p105
        %p210 = pneg %p102
        %p211 = pneg %p126
        %p212 = pneg %p123
        %p213 = pneg %p152
        %p214 = pneg %p149
        %s215 = sand.u32 %s139, 1
        %s216 = scalar_lea.sflag [#allocation4], %s215
        %s217 = sand.u32 %s139, 1
        %s218 = smul.addr %s217, 8
        %s219 = scalar_lea.vmem [#allocation3], %s218
        %p220 = scmp.lt.s32.totalorder %s21, 1
        %s221 = scalar_select %p220, %s21, 1
        %s222 = smul.addr %s221, 2
        %s223 = smul.addr %s222, 4
        %s224 = scalar_lea.vmem %s0, %s223
        %v225 = vld [vmem:[%s224] sm:$0xff]
        %v227 = vcombine.high %v225, %v225
        %vm229 = vcmask 1043456
        %v230 = vsel %vm229, %v225, 0.0
        %v231 = vsel %vm229, %v227, 0.0
        %v232 = vadd.f32 %v230, %v231
        %233 = vadd.xlane.f32.xlu0 %v232
        %v234 = vpop.xlane.xlu0 %233
        %v235 = vmul.f32 %v234, 0.00390625
        %v236 = vld [vmem:[%s1] sm:$0xf]
        %v237 = vld [vmem:[#allocation2] sm:$0x1]
        %v238 = vld [vmem:[%s3] sm:$0xf]
        %v239 = vld [vmem:[%s4] sm:$0xf]
        %v240 = vmul.f32 %v236, %v235
        %vm241 = vcmask 3072
        %v242 = vsel %vm241, %v240, 0.0
        %v243 = vrot.slane %v242, 4
        %v244 = vadd.f32 %v242, %v243
        %v245 = vrot.slane %v244, 2
        %v246 = vadd.f32 %v244, %v245
        %v247 = vrot.slane %v246, 1
        %v248 = vadd.f32 %v246, %v247
        %v249 = vadd.f32 %v248, %v237
        %v250 = vmax.f32 %v249, 0.0
        %v251 = vlaneseq
        %v252 = vshrl.u32 %v251, 7
        %v253 = vsub.s32 0, %v252
        %v254 = vrot.slane %v250, %v253
        %v255 = vmul.f32 %v238, %v254
        %v256 = vadd.f32 %v255, 0.0
        %v257 = vadd.f32 %v256, %v239
        %v258 = vsub.f32 0.0, %v257
        %v259 = vmul.f32 %v258, 1.442695
        %v260 = vpow.pop %v259
        %v261 = vadd.f32 %v260, 1.0
        %v262 = vrcp.pop %v261
        %v263 = vmul.f32 1.0, %v262
        %265 = vset.pattern.permute.xlu0 0
        %266 = vperm.xlu0 %265, %v263
        %v267 = vpop.permute.xlu0 %266
        %v269 = vunpack.c.l.s4 839922192
        %v270 = vunpack.c.0.s8 %v269
        %v271 = vlaneseq
        %v272 = vshrl.u32 %v271, 7
        %v273 = vsub.s32 %v270, %v272
        %v274 = vrot.slane %v267, %v273
        %v276 = vmul.f32 %v225, %v274
        %277 = vst [vmem:[%s219] sm:$0xff] %v276
        %s278 = sand.u32 %s139, 1
        %s279 = scalar_lea.sflag [#allocation4], %s278
        %s280 = sand.u32 %s139, 1
        %s281 = smul.addr %s280, 8
        %s282 = scalar_lea.vmem [#allocation3], %s281
        // Predicated region
        $region41: #{tpu_custom_call.1} parent=39 // pred_check
          %p283 = pneg %p149
        $region42: #{tpu_custom_call.1} parent=39 // pred_check_branch
          %285 = sbr.rel (%p283) target = $region44
        $region43: #{tpu_custom_call.1} parent=39 // pred_region
          %s287 = ssub.s32 128, 128
          %288 = vsyncadd %s279, %s287
          %s289 = smul.addr %s21, 2
          %s290 = smul.addr %s289, 64
          %s291 = scalar_lea.hbm %s5, %s290
          %s293 = sshll.u32 %s282, 4
          %s294 = int_to_ptr.vmem [resolvable:$true] %s293
          %296 = dma.vmem_to_hbm [thread:$0]  %s294, 128, %s291, %s279
        $region44: #{tpu_custom_call.1} parent=39 // pred_fallthru
          _
      $region40: #{tpu_custom_call.1} parent=5 // pred_fallthru
        _
      %p297 = scmp.le.s32.totalorder 2, %s16
      // Predicated region
      $region45: #{tpu_custom_call.1} parent=5 // pred_check
        %p298 = pneg %p297
      $region46: #{tpu_custom_call.1} parent=5 // pred_check_branch
        %300 = sbr.rel (%p298) target = $region48
      $region47: #{tpu_custom_call.1} parent=5 // pred_region
        %s301 = ssub.s32 %s16, 2
        // Predicated region
        $region49: #{tpu_custom_call.1} parent=47 // pred_check
          %p302 = pneg %p155
        $region50: #{tpu_custom_call.1} parent=47 // pred_check_branch
          %304 = sbr.rel (%p302) target = $region52
        $region51: #{tpu_custom_call.1} parent=47 // pred_region
          %s305 = sand.u32 %s140, 1
          %s306 = scalar_lea.sflag [#allocation4], %s305
          %s307 = sand.u32 %s140, 1
          %s308 = smul.addr %s307, 8
          %s309 = scalar_lea.vmem [#allocation3], %s308
          %310 = dma.done %s306, 128
        $region52: #{tpu_custom_call.1} parent=47 // pred_fallthru
          _
      $region48: #{tpu_custom_call.1} parent=5 // pred_fallthru
        _
    $region6: #{tpu_custom_call.1} parent=1 // loop_footer
      %s20 = sadd.s32 1, %s16
    $region7: #{tpu_custom_call.1} parent=1 // loop_footer_branch
      %15 = sbr.rel target = $region3
    $region8: #{tpu_custom_call.1} parent=1 // loop_exit
      _
    %311 = vsyncpa [#allocation4], 1
    %s312 = scalar_lea.sflag [#allocation4], 1
    %313 = vsyncpa %s312, 1

</llo_original>
